<compile_context>
chip_gen: v5e
topology: v5e:2x2
jax: 0.10.0
libtpu: 0.0.40
codegen_flags: <defaults>
</compile_context>

<pallas_src>
import jax
import jax.numpy as jnp
from jax import lax
from jax.experimental import pallas as pl
from jax.experimental.pallas import tpu as pltpu

_LANE = 128


def _round_up(a, b):
    return -(-a // b) * b


def mlp_kernel(x_ref, w1t_ref, b1_ref, w2t_ref, b2_ref, w3_ref, b3_ref,
               prob_ref, pred_ref):
    # x tile: (TILE, F). Upcast in-kernel (free for f32; cheap for bf16 callers).
    x = x_ref[...].astype(jnp.float32)

    # Layer 1 (scaler already folded into w1t/b1), batch-on-lanes result (H1, TILE).
    # Contraction 'hf,tf->ht' == the q.k^T dimension numbers used by flash attention.
    h1 = lax.dot_general(w1t_ref[...], x, (((1,), (1,)), ((), ())),
                         preferred_element_type=jnp.float32)
    h1 = jnp.maximum(h1 + b1_ref[...], 0.0)            # (H1, TILE) lane-dense

    # Layer 2 (Dropout identity in eval): canonical (H2,H1)@(H1,TILE).
    h2 = lax.dot_general(w2t_ref[...], h1, (((1,), (0,)), ((), ())),
                         preferred_element_type=jnp.float32)
    h2 = jnp.maximum(h2 + b2_ref[...], 0.0)             # (H2, TILE) lane-dense

    # Output layer: (1,H2)@(H2,TILE) -> (1, TILE); b3 is a scalar in SMEM.
    logit = lax.dot_general(w3_ref[...], h2, (((1,), (0,)), ((), ())),
                            preferred_element_type=jnp.float32) + b3_ref[0]

    # sigmoid(logit) = 1 / (1 + exp(-logit)); exp + reciprocal run on the idle EUP.
    prob = pl.reciprocal(1.0 + jnp.exp(-logit), approx=True)

    prob_ref[0] = prob.astype(prob_ref.dtype)
    # (logit > 0) is exactly (sigmoid(logit) > 0.5); emit int32 directly so no
    # wrapper-side cast pass is needed.
    pred_ref[0] = (logit > 0.0).astype(pred_ref.dtype)


def mlp_binary_classifier_forward(x, mean, std, w1, b1, w2, b2, w3, b3,
                                  *, max_tile_rows=8192, core_parallel=False):
    """x: (N, F) f32 (or bf16). Weights pre-transposed to (in, out).
    Returns (prob (N,1) f32, pred (N,1) i32), matching MLP.forward /
    MLPEstimator.forward in eval mode."""
    n, f = x.shape
    h1_dim = w1.shape[1]
    h2_dim = w2.shape[1]

    # ---- Fold StandardScaler into layer 1 (one-time tiny param prep, exact) ----
    # ((x - mean)/std) @ W1 + b1 == x @ (W1 * (1/std).T) + (b1 - (mean/std) @ W1)
    inv_std = jnp.where(std == 0.0, 1.0, 1.0 / std)      # sklearn: zero-variance -> scale 1
    w1_eff = w1 * inv_std.reshape(f, 1)                  # (F, H1)
    b1_eff = b1 - (mean * inv_std) @ w1                  # (1, H1)

    # Batch-on-lanes parameter layout (tiny one-time transposes/reshapes).
    w1t = w1_eff.T                                       # (H1, F)
    b1_col = b1_eff.reshape(h1_dim, 1)                   # (H1, 1)
    w2t = w2.T                                           # (H2, H1)
    b2_col = b2.reshape(h2_dim, 1)                       # (H2, 1)
    w3_row = w3.reshape(1, h2_dim)                       # (1, H2)
    b3_s = b3.reshape(1)                                 # scalar -> SMEM

    # ---- Batch tiling: balanced row tiles, padded to the lane width ----
    n_lane = _round_up(max(n, 1), _LANE)
    num_tiles = -(-n_lane // max_tile_rows)
    if core_parallel and n_lane >= 2 * _LANE:
        num_tiles = max(num_tiles, 2)                    # keep both v7x TCs busy
    tile_rows = _round_up(-(-n_lane // num_tiles), _LANE)
    n_pad = tile_rows * num_tiles

    x_pad = x if n_pad == n else jnp.zeros((n_pad, f), x.dtype).at[:n].set(x)

    def const_spec(shape):
        # Full-array block, resident in VMEM across the whole batch grid.
        return pl.BlockSpec(shape, lambda i: (0,) * len(shape))

    out_block = pl.BlockSpec((1, 1, tile_rows), lambda i: (i, 0, 0))

    batch_sem = pltpu.CORE_PARALLEL if core_parallel else "parallel"

    prob_t, pred_t = pl.pallas_call(
        mlp_kernel,
        out_shape=(
            jax.ShapeDtypeStruct((num_tiles, 1, tile_rows), jnp.float32),
            jax.ShapeDtypeStruct((num_tiles, 1, tile_rows), jnp.int32),
        ),
        grid=(num_tiles,),
        in_specs=[
            pl.BlockSpec((tile_rows, f), lambda i: (i, 0)),   # x tile (double-buffered)
            const_spec((h1_dim, f)),                          # W1^T (scaler folded in)
            const_spec((h1_dim, 1)),                          # b1 column
            const_spec((h2_dim, h1_dim)),                     # W2^T
            const_spec((h2_dim, 1)),                          # b2 column
            const_spec((1, h2_dim)),                          # W3 row
            pl.BlockSpec(memory_space=pltpu.MemorySpace.SMEM),  # b3 scalar
        ],
        out_specs=(out_block, out_block),
        compiler_params=pltpu.CompilerParams(
            dimension_semantics=(batch_sem,),
            vmem_limit_bytes=48 * 1024 * 1024),
    )(x_pad, w1t, b1_col, w2t, b2_col, w3_row, b3_s)

    # Lane-dense slabs -> (N, 1). Reshape is layout-trivial; the slice only copies
    # when padding was added. No dtype casts here (kernel already emits f32 / i32).
    prob = prob_t.reshape(n_pad, 1)[:n]
    pred = pred_t.reshape(n_pad, 1)[:n]
    return prob, pred


def init_params(key, in_features, hidden_sizes, out_features):
    """Deterministic PyTorch-Linear-style init (uniform +-1/sqrt(fan_in)).
    Weights returned already transposed to (in, out)."""
    sizes = [in_features] + list(hidden_sizes) + [out_features]
    params = []
    for i in range(len(sizes) - 1):
        fan_in, fan_out = sizes[i], sizes[i + 1]
        key, kw, kb = jax.random.split(key, 3)
        bound = 1.0 / jnp.sqrt(jnp.float32(fan_in))
        w = jax.random.uniform(kw, (fan_in, fan_out), jnp.float32, -bound, bound)
        b = jax.random.uniform(kb, (1, fan_out), jnp.float32, -bound, bound)
        params.append((w, b))
    return params


if __name__ == "__main__":
    # Module implies: input_size = len(features) = 15, binary output = 1.
    batch = 8
    in_features = 15
    hidden_sizes = (32, 32)
    out_features = 1

    key = jax.random.PRNGKey(0)
    key, kx, km, ks = jax.random.split(key, 4)

    x = jax.random.normal(kx, (batch, in_features), jnp.float32) * 3.0 + 1.0
    # Synthetic StandardScaler statistics (deterministic).
    mean = jax.random.normal(km, (1, in_features), jnp.float32)
    std = jax.random.uniform(ks, (1, in_features), jnp.float32, 0.5, 2.0)

    (w1, b1), (w2, b2), (w3, b3) = init_params(
        key, in_features, hidden_sizes, out_features)

    fwd = jax.jit(mlp_binary_classifier_forward)
    prob, pred = fwd(x, mean, std, w1, b1, w2, b2, w3, b3)
    jax.block_until_ready((prob, pred))

    # Pure-JAX reference (original, un-folded formulation).
    xs = (x - mean) / std
    r1 = jnp.maximum(xs @ w1 + b1, 0.0)
    r2 = jnp.maximum(r1 @ w2 + b2, 0.0)
    logit_exp = r2 @ w3 + b3
    prob_exp = jax.nn.sigmoid(logit_exp)
    pred_exp = (logit_exp > 0.0).astype(jnp.int32)

    assert prob.shape == (batch, 1) and pred.shape == (batch, 1)
    # Approximate EUP reciprocal -> loose tolerance on prob.
    assert jnp.allclose(prob, prob_exp, atol=2e-3), "prob mismatch vs reference"
    # pred is exact except for logits within float noise of zero.
    decisive = jnp.abs(logit_exp) > 1e-4
    assert bool(jnp.all(jnp.where(decisive, pred == pred_exp, True))), "pred mismatch"

    print("KERNEL_OK")
</pallas_src>

<mosaic_0001>
module attributes {stable_mosaic.version = 11 : i64} {
  func.func @mlp_kernel(%arg0: i32, %arg1: memref<128x15xf32, #tpu.memory_space<vmem>>, %arg2: memref<32x15xf32, #tpu.memory_space<vmem>>, %arg3: memref<32x1xf32, #tpu.memory_space<vmem>>, %arg4: memref<32x32xf32, #tpu.memory_space<vmem>>, %arg5: memref<32x1xf32, #tpu.memory_space<vmem>>, %arg6: memref<1x32xf32, #tpu.memory_space<vmem>>, %arg7: memref<1xf32, #tpu.memory_space<smem>>, %arg8: memref<1x1x128xf32, #tpu.memory_space<vmem>>, %arg9: memref<1x1x128xi32, #tpu.memory_space<vmem>>) attributes {dimension_semantics = [#tpu.dimension_semantics<parallel>], iteration_bounds = array<i64: 1>, scalar_prefetch = 0 : i64, scratch_operands = 0 : i64, tpu.core_type = #tpu.core_type<tc>, window_params = [{transform_indices = @transform_0, window_bounds = array<i64: 128, 15>}, {pipeline_mode = #tpu.pipeline_mode<synchronous>, transform_indices = @transform_1, window_bounds = array<i64: 32, 15>}, {pipeline_mode = #tpu.pipeline_mode<synchronous>, transform_indices = @transform_2, window_bounds = array<i64: 32, 1>}, {pipeline_mode = #tpu.pipeline_mode<synchronous>, transform_indices = @transform_3, window_bounds = array<i64: 32, 32>}, {pipeline_mode = #tpu.pipeline_mode<synchronous>, transform_indices = @transform_4, window_bounds = array<i64: 32, 1>}, {pipeline_mode = #tpu.pipeline_mode<synchronous>, transform_indices = @transform_5, window_bounds = array<i64: 1, 32>}, {transform_indices = @transform_6, window_bounds = array<i64: 1>}, {transform_indices = @transform_7, window_bounds = array<i64: 1, 1, 128>}, {transform_indices = @transform_8, window_bounds = array<i64: 1, 1, 128>}]} {
    %c0 = arith.constant 0 : index
    %c0_0 = arith.constant 0 : index
    %0 = vector.load %arg1[%c0, %c0_0] : memref<128x15xf32, #tpu.memory_space<vmem>>, vector<128x15xf32>
    %c0_1 = arith.constant 0 : index
    %c0_2 = arith.constant 0 : index
    %1 = vector.load %arg2[%c0_1, %c0_2] : memref<32x15xf32, #tpu.memory_space<vmem>>, vector<32x15xf32>
    %cst = arith.constant dense<0.000000e+00> : vector<32x128xf32>
    %2 = tpu.matmul %1, %0, %cst {dimension_numbers = #tpu.dot_dimension_numbers<[1], [1], [0], [0], [0, 0, 1, 0], [], []>} : vector<32x15xf32>, vector<128x15xf32>, vector<32x128xf32> -> vector<32x128xf32>
    %c0_3 = arith.constant 0 : index
    %c0_4 = arith.constant 0 : index
    %3 = vector.load %arg3[%c0_3, %c0_4] : memref<32x1xf32, #tpu.memory_space<vmem>>, vector<32x1xf32>
    %4 = vector.broadcast %3 : vector<32x1xf32> to vector<32x128xf32>
    %5 = arith.addf %2, %4 : vector<32x128xf32>
    %cst_5 = arith.constant 0.000000e+00 : f32
    %6 = vector.broadcast %cst_5 : f32 to vector<32x128xf32>
    %7 = arith.maximumf %5, %6 : vector<32x128xf32>
    %c0_6 = arith.constant 0 : index
    %c0_7 = arith.constant 0 : index
    %8 = vector.load %arg4[%c0_6, %c0_7] : memref<32x32xf32, #tpu.memory_space<vmem>>, vector<32x32xf32>
    %cst_8 = arith.constant dense<0.000000e+00> : vector<32x128xf32>
    %9 = tpu.matmul %8, %7, %cst_8 {dimension_numbers = #tpu.dot_dimension_numbers<[1], [0], [0], [1], [0, 0, 1, 1], [], []>} : vector<32x32xf32>, vector<32x128xf32>, vector<32x128xf32> -> vector<32x128xf32>
    %c0_9 = arith.constant 0 : index
    %c0_10 = arith.constant 0 : index
    %10 = vector.load %arg5[%c0_9, %c0_10] : memref<32x1xf32, #tpu.memory_space<vmem>>, vector<32x1xf32>
    %11 = vector.broadcast %10 : vector<32x1xf32> to vector<32x128xf32>
    %12 = arith.addf %9, %11 : vector<32x128xf32>
    %cst_11 = arith.constant 0.000000e+00 : f32
    %13 = vector.broadcast %cst_11 : f32 to vector<32x128xf32>
    %14 = arith.maximumf %12, %13 : vector<32x128xf32>
    %c0_12 = arith.constant 0 : index
    %c0_13 = arith.constant 0 : index
    %15 = vector.load %arg6[%c0_12, %c0_13] : memref<1x32xf32, #tpu.memory_space<vmem>>, vector<1x32xf32>
    %cst_14 = arith.constant dense<0.000000e+00> : vector<1x128xf32>
    %16 = tpu.matmul %15, %14, %cst_14 {dimension_numbers = #tpu.dot_dimension_numbers<[1], [0], [0], [1], [0, 0, 1, 1], [], []>} : vector<1x32xf32>, vector<32x128xf32>, vector<1x128xf32> -> vector<1x128xf32>
    %c0_15 = arith.constant 0 : index
    %17 = memref.load %arg7[%c0_15] : memref<1xf32, #tpu.memory_space<smem>>
    %18 = vector.broadcast %17 : f32 to vector<1x128xf32>
    %19 = arith.addf %16, %18 : vector<1x128xf32>
    %cst_16 = arith.constant 0.000000e+00 : f32
    %20 = vector.broadcast %cst_16 : f32 to vector<1x128xf32>
    %21 = arith.subf %20, %19 : vector<1x128xf32>
    %22 = math.exp %21 : vector<1x128xf32>
    %cst_17 = arith.constant 1.000000e+00 : f32
    %23 = vector.broadcast %cst_17 : f32 to vector<1x128xf32>
    %24 = arith.addf %23, %22 : vector<1x128xf32>
    %25 = tpu.reciprocal %24 {approx = true} : vector<1x128xf32> -> vector<1x128xf32>
    %c0_18 = arith.constant 0 : index
    %c0_19 = arith.constant 0 : index
    %c0_20 = arith.constant 0 : index
    %26 = vector.load %arg8[%c0_18, %c0_19, %c0_20] : memref<1x1x128xf32, #tpu.memory_space<vmem>>, vector<1x1x128xf32>
    %27 = vector.shape_cast %26 : vector<1x1x128xf32> to vector<1x128xf32>
    %28 = vector.shape_cast %25 : vector<1x128xf32> to vector<1x1x128xf32>
    tpu.vector_store %arg8[%c0_18, %c0_19, %c0_20], %28 {strides = array<i32>} : memref<1x1x128xf32, #tpu.memory_space<vmem>>, vector<1x1x128xf32>,
    %cst_21 = arith.constant 0.000000e+00 : f32
    %29 = vector.broadcast %cst_21 : f32 to vector<1x128xf32>
    %30 = arith.cmpf ogt, %19, %29 : vector<1x128xf32>
    %31 = arith.extui %30 : vector<1x128xi1> to vector<1x128xi32>
    %c0_22 = arith.constant 0 : index
    %c0_23 = arith.constant 0 : index
    %c0_24 = arith.constant 0 : index
    %32 = vector.load %arg9[%c0_22, %c0_23, %c0_24] : memref<1x1x128xi32, #tpu.memory_space<vmem>>, vector<1x1x128xi32>
    %33 = vector.shape_cast %32 : vector<1x1x128xi32> to vector<1x128xi32>
    %34 = vector.shape_cast %31 : vector<1x128xi32> to vector<1x1x128xi32>
    tpu.vector_store %arg9[%c0_22, %c0_23, %c0_24], %34 {strides = array<i32>} : memref<1x1x128xi32, #tpu.memory_space<vmem>>, vector<1x1x128xi32>,
    return
  }
  func.func @transform_0(%arg0: i32) -> (i32, i32) {
    %c0_i32 = arith.constant 0 : i32
    %c0_i32_0 = arith.constant 0 : i32
    return %arg0, %c0_i32 : i32, i32
  }
  func.func @transform_1(%arg0: i32) -> (i32, i32) {
    %c0_i32 = arith.constant 0 : i32
    %c0_i32_0 = arith.constant 0 : i32
    %c0_i32_1 = arith.constant 0 : i32
    return %c0_i32, %c0_i32_0 : i32, i32
  }
  func.func @transform_2(%arg0: i32) -> (i32, i32) {
    %c0_i32 = arith.constant 0 : i32
    %c0_i32_0 = arith.constant 0 : i32
    %c0_i32_1 = arith.constant 0 : i32
    return %c0_i32, %c0_i32_0 : i32, i32
  }
  func.func @transform_3(%arg0: i32) -> (i32, i32) {
    %c0_i32 = arith.constant 0 : i32
    %c0_i32_0 = arith.constant 0 : i32
    %c0_i32_1 = arith.constant 0 : i32
    return %c0_i32, %c0_i32_0 : i32, i32
  }
  func.func @transform_4(%arg0: i32) -> (i32, i32) {
    %c0_i32 = arith.constant 0 : i32
    %c0_i32_0 = arith.constant 0 : i32
    %c0_i32_1 = arith.constant 0 : i32
    return %c0_i32, %c0_i32_0 : i32, i32
  }
  func.func @transform_5(%arg0: i32) -> (i32, i32) {
    %c0_i32 = arith.constant 0 : i32
    %c0_i32_0 = arith.constant 0 : i32
    %c0_i32_1 = arith.constant 0 : i32
    return %c0_i32, %c0_i32_0 : i32, i32
  }
  func.func @transform_6(%arg0: i32) -> i32 {
    %c0_i32 = arith.constant 0 : i32
    %c0_i32_0 = arith.constant 0 : i32
    return %c0_i32 : i32
  }
  func.func @transform_7(%arg0: i32) -> (i32, i32, i32) {
    %c0_i32 = arith.constant 0 : i32
    %c0_i32_0 = arith.constant 0 : i32
    %c0_i32_1 = arith.constant 0 : i32
    return %arg0, %c0_i32, %c0_i32_0 : i32, i32, i32
  }
  func.func @transform_8(%arg0: i32) -> (i32, i32, i32) {
    %c0_i32 = arith.constant 0 : i32
    %c0_i32_0 = arith.constant 0 : i32
    %c0_i32_1 = arith.constant 0 : i32
    return %arg0, %c0_i32, %c0_i32_0 : i32, i32, i32
  }
}

</mosaic_0001>

<llo_original>
// kernel: mlp_binary_classifier_forward.1
$region0: #{mlp_binary_classifier_forward.1}
  #allocation0 [shape = 'u32[]', space=smem, size = 0x4, offset = 0x4, fixed_abs, tag = 'smem constant byte address 0x4 - core index']
  #allocation1 [shape = 'u32[72,128]{1,0:T(1,128)}', space=vmem, size = 0x9000, scoped, tag = 'internal scratch']
  #allocation2 [shape = 'f32[1]{0:T(128)S(6)}', space=smem, size = 0x200, scoped, tag = 'scoped memory for mlp_binary_classifier_forward.1']
  %s0 = inlined_call_operand.vmem [shape: f32[128,15], index: 0, kind: input, shape index: {}]
  %s1 = inlined_call_operand.vmem [shape: f32[32,15], index: 1, kind: input, shape index: {}]
  %s2 = inlined_call_operand.vmem [shape: f32[32,1], index: 2, kind: input, shape index: {}]
  %s3 = inlined_call_operand.vmem [shape: f32[32,32], index: 3, kind: input, shape index: {}]
  %s4 = inlined_call_operand.vmem [shape: f32[32,1], index: 4, kind: input, shape index: {}]
  %s5 = inlined_call_operand.vmem [shape: f32[1,32], index: 5, kind: input, shape index: {}]
  %s6 = inlined_call_operand.<no memory space> [shape: f32[1], index: 6, kind: input, shape index: {}]
  %s7 = inlined_call_operand.vmem [shape: f32[1,1,128], index: 7, kind: output, shape index: {0}]
  %s8 = inlined_call_operand.vmem [shape: s32[1,1,128], index: 8, kind: output, shape index: {1}]
  %9 = xla_tuple %s7, %s8
  %s10 = sld [smem:[#allocation0]]
  $region46: #{mlp_binary_classifier_forward.1} parent=0
    _
  %s12 = ssub.s32 1, %s10
  %s13 = scalar_select 0, %s12, %s10
  %14 = sst [smem:[#allocation2]] %s6
  // Predicated region
  $region2: #{mlp_binary_classifier_forward.1} parent=0 // pred_check
    _
  $region3: #{mlp_binary_classifier_forward.1} parent=0 // pred_check_branch
    %16 = sbr.rel (0) target = $region5
  $region4: #{mlp_binary_classifier_forward.1} parent=0 // pred_region
    _
  $region5: #{mlp_binary_classifier_forward.1} parent=0 // pred_fallthru
    _
  // Predicated region
  $region6: #{mlp_binary_classifier_forward.1} parent=0 // pred_check
    _
  $region7: #{mlp_binary_classifier_forward.1} parent=0 // pred_check_branch
    %18 = sbr.rel (0) target = $region9
  $region8: #{mlp_binary_classifier_forward.1} parent=0 // pred_region
    _
  $region9: #{mlp_binary_classifier_forward.1} parent=0 // pred_fallthru
    _
  // Predicated region
  $region10: #{mlp_binary_classifier_forward.1} parent=0 // pred_check
    _
  $region11: #{mlp_binary_classifier_forward.1} parent=0 // pred_check_branch
    %20 = sbr.rel (0) target = $region13
  $region12: #{mlp_binary_classifier_forward.1} parent=0 // pred_region
    _
  $region13: #{mlp_binary_classifier_forward.1} parent=0 // pred_fallthru
    _
  // Predicated region
  $region14: #{mlp_binary_classifier_forward.1} parent=0 // pred_check
    _
  $region15: #{mlp_binary_classifier_forward.1} parent=0 // pred_check_branch
    %22 = sbr.rel (0) target = $region17
  $region16: #{mlp_binary_classifier_forward.1} parent=0 // pred_region
    _
  $region17: #{mlp_binary_classifier_forward.1} parent=0 // pred_fallthru
    _
  // Predicated region
  $region18: #{mlp_binary_classifier_forward.1} parent=0 // pred_check
    _
  $region19: #{mlp_binary_classifier_forward.1} parent=0 // pred_check_branch
    %24 = sbr.rel (0) target = $region21
  $region20: #{mlp_binary_classifier_forward.1} parent=0 // pred_region
    _
  $region21: #{mlp_binary_classifier_forward.1} parent=0 // pred_fallthru
    _
  // Predicated region
  $region22: #{mlp_binary_classifier_forward.1} parent=0 // pred_check
    _
  $region23: #{mlp_binary_classifier_forward.1} parent=0 // pred_check_branch
    %26 = sbr.rel (0) target = $region25
  $region24: #{mlp_binary_classifier_forward.1} parent=0 // pred_region
    _
  $region25: #{mlp_binary_classifier_forward.1} parent=0 // pred_fallthru
    _
  // Predicated region
  $region26: #{mlp_binary_classifier_forward.1} parent=0 // pred_check
    _
  $region27: #{mlp_binary_classifier_forward.1} parent=0 // pred_check_branch
    %28 = sbr.rel (0) target = $region29
  $region28: #{mlp_binary_classifier_forward.1} parent=0 // pred_region
    _
  $region29: #{mlp_binary_classifier_forward.1} parent=0 // pred_fallthru
    _
  %v29 = vld [vmem:[%s0] sm:$0xff]
  %v30 = vld [vmem:[%s0 + $0x8] sm:$0xff]
  %v31 = vld [vmem:[%s0 + $0x10] sm:$0xff]
  %v32 = vld [vmem:[%s0 + $0x18] sm:$0xff]
  %v33 = vld [vmem:[%s0 + $0x20] sm:$0xff]
  %v34 = vld [vmem:[%s0 + $0x28] sm:$0xff]
  %v35 = vld [vmem:[%s0 + $0x30] sm:$0xff]
  %v36 = vld [vmem:[%s0 + $0x38] sm:$0xff]
  %v37 = vld [vmem:[%s0 + $0x40] sm:$0xff]
  %v38 = vld [vmem:[%s0 + $0x48] sm:$0xff]
  %v39 = vld [vmem:[%s0 + $0x50] sm:$0xff]
  %v40 = vld [vmem:[%s0 + $0x58] sm:$0xff]
  %v41 = vld [vmem:[%s0 + $0x60] sm:$0xff]
  %v42 = vld [vmem:[%s0 + $0x68] sm:$0xff]
  %v43 = vld [vmem:[%s0 + $0x70] sm:$0xff]
  %v44 = vld [vmem:[%s0 + $0x78] sm:$0xff]
  %v45 = vld [vmem:[%s1] sm:$0xff]
  %v46 = vld [vmem:[%s1 + $0x8] sm:$0xff]
  %v47 = vld [vmem:[%s1 + $0x10] sm:$0xff]
  %v48 = vld [vmem:[%s1 + $0x18] sm:$0xff]
  %v49 = vld [vmem:[%s2] sm:$0xff]
  %v50 = vld [vmem:[%s2 + $0x8] sm:$0xff]
  %v51 = vld [vmem:[%s2 + $0x10] sm:$0xff]
  %v52 = vld [vmem:[%s2 + $0x18] sm:$0xff]
  %54 = vset.pattern.permute.xlu0 0
  %55 = vperm.xlu0 %54, %v49
  %v56 = vpop.permute.xlu0 %55
  %59 = vset.pattern.permute.xlu0 0
  %60 = vperm.xlu0 %59, %v50
  %v61 = vpop.permute.xlu0 %60
  %64 = vset.pattern.permute.xlu0 0
  %65 = vperm.xlu0 %64, %v51
  %v66 = vpop.permute.xlu0 %65
  %69 = vset.pattern.permute.xlu0 0
  %70 = vperm.xlu0 %69, %v52
  %v71 = vpop.permute.xlu0 %70
  %vm73 = vcmask 121856
  %v75 = vsel %vm73, %v45, 0
  %v78 = vsel %vm73, %v46, 0
  %v81 = vsel %vm73, %v47, 0
  %v84 = vsel %vm73, %v48, 0
  %v87 = vsel %vm73, %v29, 0
  %v90 = vsel %vm73, %v30, 0
  %v93 = vsel %vm73, %v31, 0
  %v96 = vsel %vm73, %v32, 0
  %v99 = vsel %vm73, %v33, 0
  %v102 = vsel %vm73, %v34, 0
  %v105 = vsel %vm73, %v35, 0
  %v108 = vsel %vm73, %v36, 0
  %v111 = vsel %vm73, %v37, 0
  %v114 = vsel %vm73, %v38, 0
  %v117 = vsel %vm73, %v39, 0
  %v120 = vsel %vm73, %v40, 0
  %v123 = vsel %vm73, %v41, 0
  %v126 = vsel %vm73, %v42, 0
  %v129 = vsel %vm73, %v43, 0
  %v132 = vsel %vm73, %v44, 0
  %134 = vmatpush.xpose.msra.mxu0 %v132
  %135 = vmatpush.xpose.msra.mxu0 %v129
  %136 = vmatpush.xpose.msra.mxu0 %v126
  %137 = vmatpush.xpose.msra.mxu0 %v123
  %138 = vmatpush.xpose.msra.mxu0 %v120
  %139 = vmatpush.xpose.msra.mxu0 %v117
  %140 = vmatpush.xpose.msra.mxu0 %v114
  %141 = vmatpush.xpose.msra.mxu0 %v111
  %142 = vmatpush.xpose.msra.mxu0 %v108
  %143 = vmatpush.xpose.msra.mxu0 %v105
  %144 = vmatpush.xpose.msra.mxu0 %v102
  %145 = vmatpush.xpose.msra.mxu0 %v99
  %146 = vmatpush.xpose.msra.mxu0 %v96
  %147 = vmatpush.xpose.msra.mxu0 %v93
  %148 = vmatpush.xpose.msra.mxu0 %v90
  %149 = vmatpush.xpose.msra.mxu0 %v87
  %150 = vmatmul.f32.gmra.mxu0 %v75
  %v151 = vpop.f32.mrf.mxu0
  %v152 = vadd.f32 %v56, %v151
  %153 = vmatmul.f32.gmra.mxu0 %v78
  %v154 = vpop.f32.mrf.mxu0
  %v155 = vadd.f32 %v61, %v154
  %156 = vmatmul.f32.gmra.mxu0 %v81
  %v157 = vpop.f32.mrf.mxu0
  %v158 = vadd.f32 %v66, %v157
  %159 = vmatmul.f32.gmra.mxu0 %v84
  %v160 = vpop.f32.mrf.mxu0
  %v161 = vadd.f32 %v71, %v160
  %162 = vdwg.mxu0
  %v163 = vmax.f32 %v152, 0.0
  %v164 = vmax.f32 %v155, 0.0
  %v165 = vmax.f32 %v158, 0.0
  %v166 = vmax.f32 %v161, 0.0
  %v167 = vld [vmem:[%s3] sm:$0xff]
  %v168 = vld [vmem:[%s3 + $0x8] sm:$0xff]
  %v169 = vld [vmem:[%s3 + $0x10] sm:$0xff]
  %v170 = vld [vmem:[%s3 + $0x18] sm:$0xff]
  %v171 = vld [vmem:[%s4] sm:$0xff]
  %v172 = vld [vmem:[%s4 + $0x8] sm:$0xff]
  %v173 = vld [vmem:[%s4 + $0x10] sm:$0xff]
  %v174 = vld [vmem:[%s4 + $0x18] sm:$0xff]
  %176 = vset.pattern.permute.xlu0 0
  %177 = vperm.xlu0 %176, %v171
  %v178 = vpop.permute.xlu0 %177
  %181 = vset.pattern.permute.xlu0 0
  %182 = vperm.xlu0 %181, %v172
  %v183 = vpop.permute.xlu0 %182
  %186 = vset.pattern.permute.xlu0 0
  %187 = vperm.xlu0 %186, %v173
  %v188 = vpop.permute.xlu0 %187
  %191 = vset.pattern.permute.xlu0 0
  %192 = vperm.xlu0 %191, %v174
  %v193 = vpop.permute.xlu0 %192
  %vm195 = vcmask 261120
  %v197 = vsel %vm195, %v167, 0
  %v200 = vsel %vm195, %v168, 0
  %v203 = vsel %vm195, %v169, 0
  %v206 = vsel %vm195, %v170, 0
  %208 = vmatpush.msra.mxu0 0.0
  %209 = vmatpush.msra.mxu0 0.0
  %210 = vmatpush.msra.mxu0 0.0
  %211 = vmatpush.msra.mxu0 0.0
  %212 = vmatpush.msra.mxu0 0.0
  %213 = vmatpush.msra.mxu0 0.0
  %214 = vmatpush.msra.mxu0 0.0
  %215 = vmatpush.msra.mxu0 0.0
  %216 = vmatpush.msra.mxu0 0.0
  %217 = vmatpush.msra.mxu0 0.0
  %218 = vmatpush.msra.mxu0 0.0
  %219 = vmatpush.msra.mxu0 0.0
  %220 = vmatpush.msra.mxu0 %v166
  %221 = vmatpush.msra.mxu0 %v165
  %222 = vmatpush.msra.mxu0 %v164
  %223 = vmatpush.msra.mxu0 %v163
  %224 = vmatmul.f32.gmra.mxu0 %v197
  %v225 = vpop.f32.mrf.mxu0
  %v226 = vadd.f32 %v178, %v225
  %227 = vmatmul.f32.gmra.mxu0 %v200
  %v228 = vpop.f32.mrf.mxu0
  %v229 = vadd.f32 %v183, %v228
  %230 = vmatmul.f32.gmra.mxu0 %v203
  %v231 = vpop.f32.mrf.mxu0
  %v232 = vadd.f32 %v188, %v231
  %233 = vmatmul.f32.gmra.mxu0 %v206
  %v234 = vpop.f32.mrf.mxu0
  %v235 = vadd.f32 %v193, %v234
  %236 = vdwg.mxu0
  %v237 = vmax.f32 %v226, 0.0
  %v238 = vmax.f32 %v229, 0.0
  %v239 = vmax.f32 %v232, 0.0
  %v240 = vmax.f32 %v235, 0.0
  %v241 = vld [vmem:[%s5] sm:$0x1]
  %s242 = sld [smem:[#allocation2]]
  %v243 = vstv %s242
  %v245 = vsel %vm195, %v241, 0
  %247 = vmatpush.msra.mxu0 0.0
  %248 = vmatpush.msra.mxu0 0.0
  %249 = vmatpush.msra.mxu0 0.0
  %250 = vmatpush.msra.mxu0 0.0
  %251 = vmatpush.msra.mxu0 0.0
  %252 = vmatpush.msra.mxu0 0.0
  %253 = vmatpush.msra.mxu0 0.0
  %254 = vmatpush.msra.mxu0 0.0
  %255 = vmatpush.msra.mxu0 0.0
  %256 = vmatpush.msra.mxu0 0.0
  %257 = vmatpush.msra.mxu0 0.0
  %258 = vmatpush.msra.mxu0 0.0
  %259 = vmatpush.msra.mxu0 %v240
  %260 = vmatpush.msra.mxu0 %v239
  %261 = vmatpush.msra.mxu0 %v238
  %262 = vmatpush.msra.mxu0 %v237
  %263 = vmatmul.f32.gmra.mxu0 %v245
  %v264 = vpop.f32.mrf.mxu0
  %v265 = vadd.f32 %v243, %v264
  %266 = vdwg.mxu0
  %v267 = vsub.f32 0.0, %v265
  %v268 = vmul.f32 %v267, 1.442695
  %v269 = vpow.pop %v268
  %v270 = vadd.f32 %v269, 1.0
  %v271 = vrcp.pop %v270
  %272 = vst [vmem:[%s7] sm:$0x1] %v271
  %vm273 = vcmp.gt.f32.partialorder %v265, 0.0
  %v274 = vsel %vm273, 1, 0
  %275 = vst [vmem:[%s8] sm:$0x1] %v274
  // Predicated region
  $region30: #{mlp_binary_classifier_forward.1} parent=0 // pred_check
    _
  $region31: #{mlp_binary_classifier_forward.1} parent=0 // pred_check_branch
    %277 = sbr.rel (0) target = $region33
  $region32: #{mlp_binary_classifier_forward.1} parent=0 // pred_region
    _
  $region33: #{mlp_binary_classifier_forward.1} parent=0 // pred_fallthru
    _
  // Predicated region
  $region34: #{mlp_binary_classifier_forward.1} parent=0 // pred_check
    _
  $region35: #{mlp_binary_classifier_forward.1} parent=0 // pred_check_branch
    %279 = sbr.rel (0) target = $region37
  $region36: #{mlp_binary_classifier_forward.1} parent=0 // pred_region
    _
  $region37: #{mlp_binary_classifier_forward.1} parent=0 // pred_fallthru
    _
  // Predicated region
  $region38: #{mlp_binary_classifier_forward.1} parent=0 // pred_check
    _
  $region39: #{mlp_binary_classifier_forward.1} parent=0 // pred_check_branch
    %281 = sbr.rel (0) target = $region41
  $region40: #{mlp_binary_classifier_forward.1} parent=0 // pred_region
    _
  $region41: #{mlp_binary_classifier_forward.1} parent=0 // pred_fallthru
    _
  // Predicated region
  $region42: #{mlp_binary_classifier_forward.1} parent=0 // pred_check
    _
  $region43: #{mlp_binary_classifier_forward.1} parent=0 // pred_check_branch
    %283 = sbr.rel (0) target = $region45
  $region44: #{mlp_binary_classifier_forward.1} parent=0 // pred_region
    _
  $region45: #{mlp_binary_classifier_forward.1} parent=0 // pred_fallthru
    _

</llo_original>
